<compile_context>
chip_gen: v7x
topology: tpu7x:2x2x1
jax: 0.10.0
libtpu: 0.0.40
codegen_flags: <defaults>
</compile_context>

<pallas_src>
import functools

import jax
import jax.numpy as jnp
from jax import lax
from jax.experimental import pallas as pl
from jax.experimental.pallas import tpu as pltpu


def _ce2d_kernel(logits_ref, target_ref, *rest, ignore_label, num_classes,
                 num_pixels, tile_p, has_weight):
    if has_weight:
        wvec_ref, loss_ref, wsum_ref = rest
    else:
        loss_ref, wsum_ref = rest

    x = logits_ref[0].astype(jnp.float32)   # (C, TP)  classes on sublanes, pixels on lanes
    t = target_ref[0]                       # (1, TP)  int32 targets

    # Valid-pixel mask.  NOTE: targets >= num_classes (other than ignore_label)
    # are silently dropped; PyTorch's F.cross_entropy would raise instead.
    valid = (t >= 0) & (t != ignore_label) & (t < num_classes)
    if num_pixels % tile_p != 0:
        # Ragged last tile: mask lanes past the true pixel count (their logits /
        # targets are unspecified memory, so everything below is where-guarded).
        pix = pl.program_id(1) * tile_p + lax.broadcasted_iota(jnp.int32, t.shape, 1)
        valid = valid & (pix < num_pixels)
    t_safe = jnp.where(valid, t, 0)

    # Numerically stable log-sum-exp over the class (sublane) axis.
    m = jnp.max(x, axis=0, keepdims=True)                                # (1, TP)
    lse = m + jnp.log(jnp.sum(jnp.exp(x - m), axis=0, keepdims=True))    # (1, TP)

    # Gather the target-class logit via a one-hot select (no dynamic gather).
    onehot = lax.broadcasted_iota(jnp.int32, x.shape, 0) == t_safe       # (C, TP)
    picked = jnp.sum(jnp.where(onehot, x, 0.0), axis=0, keepdims=True)   # (1, TP)
    nll = lse - picked                                                   # (1, TP)

    if has_weight:
        wvec = wvec_ref[...].astype(jnp.float32)                         # (C, 1)
        w_row = jnp.sum(jnp.where(onehot, wvec, 0.0), axis=0, keepdims=True)
        loss_terms = jnp.where(valid, nll * w_row, 0.0)
        w_terms = jnp.where(valid, w_row, 0.0)
    else:
        loss_terms = jnp.where(valid, nll, 0.0)
        w_terms = valid.astype(jnp.float32)

    # Per-tile partial sums, lane-broadcast into the (1,1,1,128) output block.
    loss_ref[...] = jnp.broadcast_to(jnp.sum(loss_terms, keepdims=True), loss_ref.shape)
    wsum_ref[...] = jnp.broadcast_to(jnp.sum(w_terms, keepdims=True), wsum_ref.shape)


def _pick_tile_pixels(hw, c, itemsize, requested):
    """Pick a lane-dim pixel tile: ~2 MiB of logits per block, 128-aligned."""
    if requested is None:
        budget = 2 * 1024 * 1024
        tp = budget // max(1, c * itemsize)
        tp = max(256, min(16384, tp))
    else:
        tp = requested
    tp = max(128, (tp // 128) * 128)
    # If the whole pixel range fits in one tile, use the full dim (always legal).
    return hw if hw <= tp else tp


def cross_entropy_2d(predict, target, weight=None, *, size_average=True,
                     ignore_label=255, tile_pixels=None):
    """predict: (n, c, h, w) float; target: (n, h, w) int. Returns scalar loss."""
    n, c, h, w = predict.shape
    assert target.shape == (n, h, w)
    hw = h * w

    # Free reshapes only -- no transpose, no pad, logits DMA'd in native dtype.
    logits = predict.reshape(n, c, hw)
    tgt = target.reshape(n, 1, hw).astype(jnp.int32)

    itemsize = jnp.dtype(predict.dtype).itemsize
    tp = _pick_tile_pixels(hw, c, itemsize, tile_pixels)
    grid_p = pl.cdiv(hw, tp)
    has_weight = weight is not None

    in_specs = [
        pl.BlockSpec((1, c, tp), lambda i, j: (i, 0, j)),   # logits (native dtype)
        pl.BlockSpec((1, 1, tp), lambda i, j: (i, 0, j)),   # targets
    ]
    args = [logits, tgt]
    if has_weight:
        wvec = jnp.asarray(weight, jnp.float32).reshape(c, 1)
        in_specs.append(pl.BlockSpec((c, 1), lambda i, j: (0, 0)))
        args.append(wvec)

    kernel = functools.partial(
        _ce2d_kernel, ignore_label=ignore_label, num_classes=c,
        num_pixels=hw, tile_p=tp, has_weight=has_weight)

    # VMEM budget: double-buffered input blocks + f32 compute temporaries; keep
    # well under v7x's 64 MiB physical VMEM (v5e/v6e have 128 MiB).
    block_in_bytes = tp * (c * itemsize + 4)
    need = 2 * block_in_bytes + 8 * tp * c * 4 + (4 << 20)
    vmem_limit = int(min(56 << 20, max(32 << 20, need)))

    out_struct = jax.ShapeDtypeStruct((n, grid_p, 1, 128), jnp.float32)
    out_spec = pl.BlockSpec((1, 1, 1, 128), lambda i, j: (i, j, 0, 0))

    loss_part, w_part = pl.pallas_call(
        kernel,
        out_shape=(out_struct, out_struct),
        grid_spec=pltpu.PrefetchScalarGridSpec(
            num_scalar_prefetch=0,
            grid=(n, grid_p),
            in_specs=in_specs,
            out_specs=[out_spec, out_spec],
        ),
        compiler_params=pltpu.CompilerParams(
            dimension_semantics=("parallel", "parallel"),
            vmem_limit_bytes=vmem_limit),
    )(*args)

    loss_sum = jnp.sum(loss_part[:, :, 0, 0])
    w_sum = jnp.sum(w_part[:, :, 0, 0])
    reduced = loss_sum / w_sum if size_average else loss_sum
    # PyTorch returns zeros when no valid targets survive the mask.
    return jnp.where(w_sum > 0, reduced, jnp.float32(0.0))


def _reference(predict, target, weight=None, size_average=True, ignore_label=255):
    n, c, h, w = predict.shape
    logits = jnp.transpose(predict, (0, 2, 3, 1)).reshape(-1, c).astype(jnp.float32)
    t = target.reshape(-1).astype(jnp.int32)
    valid = (t >= 0) & (t != ignore_label) & (t < c)
    t_safe = jnp.where(valid, t, 0)
    logz = jax.scipy.special.logsumexp(logits, axis=-1)
    picked = jnp.take_along_axis(logits, t_safe[:, None], axis=-1)[:, 0]
    wvec = jnp.ones((c,), jnp.float32) if weight is None else jnp.asarray(weight, jnp.float32)
    w_row = wvec[t_safe] * valid.astype(jnp.float32)
    loss_sum = jnp.sum((logz - picked) * w_row)
    w_sum = jnp.sum(w_row)
    red = loss_sum / w_sum if size_average else loss_sum
    return jnp.where(w_sum > 0, red, 0.0)


if __name__ == "__main__":
    key = jax.random.PRNGKey(0)
    k1, k2, k3 = jax.random.split(key, 3)

    n, c, h, w = 2, 4, 16, 16
    ignore_label = 255

    predict = jax.random.normal(k1, (n, c, h, w), dtype=jnp.float32)
    target = jax.random.randint(k2, (n, h, w), 0, c, dtype=jnp.int32)
    # Sprinkle ignored pixels to exercise the mask path.
    ignore_mask = jax.random.bernoulli(k3, 0.2, (n, h, w))
    target = jnp.where(ignore_mask, ignore_label, target)

    # weight=None path (specialized kernel: no weight DMA / extra reduction).
    loss = jax.block_until_ready(
        cross_entropy_2d(predict, target, weight=None,
                         size_average=True, ignore_label=ignore_label))
    ref = _reference(predict, target, None, True, ignore_label)
    assert jnp.allclose(loss, ref, atol=1e-5, rtol=1e-5), (loss, ref)

    # Per-class-weight path.
    weight = jnp.array([0.5, 1.0, 2.0, 1.5], jnp.float32)
    loss_w = jax.block_until_ready(
        cross_entropy_2d(predict, target, weight=weight,
                         size_average=True, ignore_label=ignore_label))
    ref_w = _reference(predict, target, weight, True, ignore_label)
    assert jnp.allclose(loss_w, ref_w, atol=1e-5, rtol=1e-5), (loss_w, ref_w)

    print("KERNEL_OK")
</pallas_src>

<mosaic_0001>
module attributes {stable_mosaic.version = 11 : i64} {
  func.func @_ce2d_kernel(%arg0: i32, %arg1: i32, %arg2: memref<1x4x256xf32, #tpu.memory_space<vmem>>, %arg3: memref<1x1x256xi32, #tpu.memory_space<vmem>>, %arg4: memref<1x1x1x128xf32, #tpu.memory_space<vmem>>, %arg5: memref<1x1x1x128xf32, #tpu.memory_space<vmem>>) attributes {dimension_semantics = [#tpu.dimension_semantics<parallel>, #tpu.dimension_semantics<parallel>], iteration_bounds = array<i64: 2, 1>, scalar_prefetch = 0 : i64, scratch_operands = 0 : i64, tpu.core_type = #tpu.core_type<tc>, window_params = [{transform_indices = @transform_0, window_bounds = array<i64: 1, 4, 256>}, {transform_indices = @transform_1, window_bounds = array<i64: 1, 1, 256>}, {transform_indices = @transform_2, window_bounds = array<i64: 1, 1, 1, 128>}, {transform_indices = @transform_3, window_bounds = array<i64: 1, 1, 1, 128>}]} {
    %c0 = arith.constant 0 : index
    %c0_0 = arith.constant 0 : index
    %c0_1 = arith.constant 0 : index
    %0 = vector.load %arg2[%c0, %c0_0, %c0_1] : memref<1x4x256xf32, #tpu.memory_space<vmem>>, vector<1x4x256xf32>
    %1 = vector.shape_cast %0 : vector<1x4x256xf32> to vector<4x256xf32>
    %c0_2 = arith.constant 0 : index
    %c0_3 = arith.constant 0 : index
    %c0_4 = arith.constant 0 : index
    %2 = vector.load %arg3[%c0_2, %c0_3, %c0_4] : memref<1x1x256xi32, #tpu.memory_space<vmem>>, vector<1x1x256xi32>
    %3 = vector.shape_cast %2 : vector<1x1x256xi32> to vector<1x256xi32>
    %c0_i32 = arith.constant 0 : i32
    %4 = vector.broadcast %c0_i32 : i32 to vector<1x256xi32>
    %5 = arith.cmpi sge, %3, %4 : vector<1x256xi32>
    %c255_i32 = arith.constant 255 : i32
    %6 = vector.broadcast %c255_i32 : i32 to vector<1x256xi32>
    %7 = arith.cmpi ne, %3, %6 : vector<1x256xi32>
    %8 = arith.andi %5, %7 : vector<1x256xi1>
    %c4_i32 = arith.constant 4 : i32
    %9 = vector.broadcast %c4_i32 : i32 to vector<1x256xi32>
    %10 = arith.cmpi slt, %3, %9 : vector<1x256xi32>
    %11 = arith.andi %8, %10 : vector<1x256xi1>
    %c0_i32_5 = arith.constant 0 : i32
    %12 = vector.broadcast %c0_i32_5 : i32 to vector<1x256xi32>
    %13 = arith.select %11, %3, %12 : vector<1x256xi1>, vector<1x256xi32>
    %cst = arith.constant dense<0xFF800000> : vector<256xf32>
    %14 = vector.multi_reduction <maximumf>, %1, %cst [0] : vector<4x256xf32> to vector<256xf32>
    %15 = vector.shape_cast %14 : vector<256xf32> to vector<1x256xf32>
    %16 = vector.broadcast %15 : vector<1x256xf32> to vector<4x256xf32>
    %17 = arith.subf %1, %16 : vector<4x256xf32>
    %18 = math.exp %17 : vector<4x256xf32>
    %cst_6 = arith.constant dense<0.000000e+00> : vector<256xf32>
    %19 = vector.multi_reduction <add>, %18, %cst_6 [0] : vector<4x256xf32> to vector<256xf32>
    %20 = vector.shape_cast %19 : vector<256xf32> to vector<1x256xf32>
    %21 = math.log %20 : vector<1x256xf32>
    %22 = arith.addf %15, %21 : vector<1x256xf32>
    %23 = tpu.iota {dimensions = array<i32: 0>} : vector<4x256xi32>
    %24 = vector.broadcast %13 : vector<1x256xi32> to vector<4x256xi32>
    %25 = arith.cmpi eq, %23, %24 : vector<4x256xi32>
    %cst_7 = arith.constant 0.000000e+00 : f32
    %26 = vector.broadcast %cst_7 : f32 to vector<4x256xf32>
    %27 = arith.select %25, %1, %26 : vector<4x256xi1>, vector<4x256xf32>
    %cst_8 = arith.constant dense<0.000000e+00> : vector<256xf32>
    %28 = vector.multi_reduction <add>, %27, %cst_8 [0] : vector<4x256xf32> to vector<256xf32>
    %29 = vector.shape_cast %28 : vector<256xf32> to vector<1x256xf32>
    %30 = arith.subf %22, %29 : vector<1x256xf32>
    %cst_9 = arith.constant 0.000000e+00 : f32
    %31 = vector.broadcast %cst_9 : f32 to vector<1x256xf32>
    %32 = arith.select %11, %30, %31 : vector<1x256xi1>, vector<1x256xf32>
    %33 = arith.extui %11 : vector<1x256xi1> to vector<1x256xi32>
    %34 = arith.sitofp %33 : vector<1x256xi32> to vector<1x256xf32>
    %35 = vector.shape_cast %32 : vector<1x256xf32> to vector<1x1x256xf32>
    %cst_10 = arith.constant dense<0.000000e+00> : vector<1xf32>
    %36 = vector.multi_reduction <add>, %35, %cst_10 [1, 2] : vector<1x1x256xf32> to vector<1xf32>
    %37 = vector.shape_cast %36 : vector<1xf32> to vector<1x1x1xf32>
    %38 = vector.extract %37[0, 0, 0] : f32 from vector<1x1x1xf32>
    %39 = vector.broadcast %38 : f32 to vector<1x1xf32>
    %40 = vector.shape_cast %39 : vector<1x1xf32> to vector<1x1x1x1xf32>
    %41 = vector.broadcast %40 : vector<1x1x1x1xf32> to vector<1x1x1x128xf32>
    %c0_11 = arith.constant 0 : index
    %c0_12 = arith.constant 0 : index
    %c0_13 = arith.constant 0 : index
    %c0_14 = arith.constant 0 : index
    %42 = vector.load %arg4[%c0_11, %c0_12, %c0_13, %c0_14] : memref<1x1x1x128xf32, #tpu.memory_space<vmem>>, vector<1x1x1x128xf32>
    tpu.vector_store %arg4[%c0_11, %c0_12, %c0_13, %c0_14], %41 {strides = array<i32>} : memref<1x1x1x128xf32, #tpu.memory_space<vmem>>, vector<1x1x1x128xf32>,
    %43 = vector.shape_cast %34 : vector<1x256xf32> to vector<1x1x256xf32>
    %cst_15 = arith.constant dense<0.000000e+00> : vector<1xf32>
    %44 = vector.multi_reduction <add>, %43, %cst_15 [1, 2] : vector<1x1x256xf32> to vector<1xf32>
    %45 = vector.shape_cast %44 : vector<1xf32> to vector<1x1x1xf32>
    %46 = vector.extract %45[0, 0, 0] : f32 from vector<1x1x1xf32>
    %47 = vector.broadcast %46 : f32 to vector<1x1xf32>
    %48 = vector.shape_cast %47 : vector<1x1xf32> to vector<1x1x1x1xf32>
    %49 = vector.broadcast %48 : vector<1x1x1x1xf32> to vector<1x1x1x128xf32>
    %c0_16 = arith.constant 0 : index
    %c0_17 = arith.constant 0 : index
    %c0_18 = arith.constant 0 : index
    %c0_19 = arith.constant 0 : index
    %50 = vector.load %arg5[%c0_16, %c0_17, %c0_18, %c0_19] : memref<1x1x1x128xf32, #tpu.memory_space<vmem>>, vector<1x1x1x128xf32>
    tpu.vector_store %arg5[%c0_16, %c0_17, %c0_18, %c0_19], %49 {strides = array<i32>} : memref<1x1x1x128xf32, #tpu.memory_space<vmem>>, vector<1x1x1x128xf32>,
    return
  }
  func.func @transform_0(%arg0: i32, %arg1: i32) -> (i32, i32, i32) {
    %c0_i32 = arith.constant 0 : i32
    %c0_i32_0 = arith.constant 0 : i32
    return %arg0, %c0_i32, %arg1 : i32, i32, i32
  }
  func.func @transform_1(%arg0: i32, %arg1: i32) -> (i32, i32, i32) {
    %c0_i32 = arith.constant 0 : i32
    %c0_i32_0 = arith.constant 0 : i32
    return %arg0, %c0_i32, %arg1 : i32, i32, i32
  }
  func.func @transform_2(%arg0: i32, %arg1: i32) -> (i32, i32, i32, i32) {
    %c0_i32 = arith.constant 0 : i32
    %c0_i32_0 = arith.constant 0 : i32
    %c0_i32_1 = arith.constant 0 : i32
    return %arg0, %arg1, %c0_i32, %c0_i32_0 : i32, i32, i32, i32
  }
  func.func @transform_3(%arg0: i32, %arg1: i32) -> (i32, i32, i32, i32) {
    %c0_i32 = arith.constant 0 : i32
    %c0_i32_0 = arith.constant 0 : i32
    %c0_i32_1 = arith.constant 0 : i32
    return %arg0, %arg1, %c0_i32, %c0_i32_0 : i32, i32, i32, i32
  }
}

</mosaic_0001>

<llo_original>
// kernel: tpu_custom_call.1
$region0: #{tpu_custom_call.1}
  #allocation0 [shape = 'u32[]', space=smem, size = 0x4, offset = 0x4, fixed_abs, tag = 'smem constant byte address 0x4 - core index']
  #allocation1 [shape = 'u32[144,128]{1,0:T(1,128)}', space=vmem, size = 0x12000, scoped, tag = 'internal scratch']
  %s0 = inlined_call_operand.hbm [shape: f32[2,4,256], index: 0, kind: input, shape index: {}]
  %s1 = inlined_call_operand.hbm [shape: s32[2,1,256], index: 1, kind: input, shape index: {}]
  %s2 = inlined_call_operand.hbm [shape: f32[2,1,1,128], index: 2, kind: output, shape index: {0}]
  %s3 = inlined_call_operand.hbm [shape: f32[2,1,1,128], index: 3, kind: output, shape index: {1}]
  %4 = xla_tuple %s2, %s3
  %s5 = sld [smem:[#allocation0]]
  $region57: #{tpu_custom_call.1} parent=0
    _
  %s7 = ssub.s32 1, %s5
  %s8 = scalar_select 0, %s7, %s5
  $region1: #{tpu_custom_call.1} parent=0
    #allocation2 [shape = 'u8[8192]{0}', space=vmem, size = 0x2000, scoped, tag = 'input window, operand 0']
    #allocation3 [shape = 's32[2]{0}', space=sflag, size = 0x8, scoped, tag = 'scoped memory for tpu_custom_call.1']
    #allocation4 [shape = 's32[2]{0}', space=sflag, size = 0x8, scoped, tag = 'scoped memory for tpu_custom_call.1']
    #allocation5 [shape = 'u8[2048]{0}', space=vmem, size = 0x800, scoped, tag = 'input window, operand 1']
    #allocation6 [shape = 's32[2]{0}', space=sflag, size = 0x8, scoped, tag = 'scoped memory for tpu_custom_call.1']
    #allocation7 [shape = 'u8[1024]{0}', space=vmem, size = 0x400, scoped, tag = 'output window, operand 0']
    #allocation8 [shape = 'u8[1024]{0}', space=vmem, size = 0x400, scoped, tag = 'output window, operand 1']
    #allocation9 [shape = 's32[2]{0}', space=sflag, size = 0x8, scoped, tag = 'scoped memory for tpu_custom_call.1']
    %9 = vsyncpa [#allocation3], 0
    %s10 = scalar_lea.sflag [#allocation3], 1
    %11 = vsyncpa %s10, 0
    %12 = vsyncpa [#allocation6], 0
    %s13 = scalar_lea.sflag [#allocation6], 1
    %14 = vsyncpa %s13, 0
    %15 = vsyncpa [#allocation4], 0
    %s16 = scalar_lea.sflag [#allocation4], 1
    %17 = vsyncpa %s16, 0
    %18 = vsyncpa [#allocation9], 0
    %s19 = scalar_lea.sflag [#allocation9], 1
    %20 = vsyncpa %s19, 0
    loop: start=0, step=1, limit=4
    $region2: #{tpu_custom_call.1} parent=1 // loop_pre_header
      _
    $region3: #{tpu_custom_call.1} parent=1 // loop_header
      %s22 = sphi 0, %s26
      %p23 = scmp.ge.s32.totalorder %s22, 4
      %s29 = sphi 0, %s41
      %s30 = sphi 0, %s37
      %s31 = sphi 0, %s29
      %s32 = sphi 0, %s30
      %s33 = sphi 0, %s31
      %s34 = sphi 0, %s32
      %s46 = sphi 0, %s48
      %s49 = sphi 0, %s46
      %s50 = sphi 0, %s49
      %s66 = sphi 0, %s50
      %s74 = sphi 0, %s76
      %s77 = sphi 0, %s74
      %s78 = sphi 0, %s77
      %s94 = sphi 0, %s78
      %s102 = sphi 0, %s104
      %s105 = sphi 0, %s102
      %s106 = sphi 0, %s105
      %s122 = sphi 0, %s106
      %s130 = sphi 0, %s132
      %s133 = sphi 0, %s130
      %s134 = sphi 0, %s133
      %s150 = sphi 0, %s134
    $region4: #{tpu_custom_call.1} parent=1 // loop_header_branch
      %25 = sbr.rel (%p23) target = $region8
    $region5: #{tpu_custom_call.1} parent=1 // loop_body
      %s27 = ssub.s32 %s22, 1
      %s28 = ssub.s32 %s22, 2
      %s35 = sadd.s32 1, %s30
      %p36 = scmp.ge.s32.totalorder %s35, 1
      %s37 = scalar_select %p36, 0, %s35
      %s38 = sadd.s32 1, %s29
      %s39 = scalar_select %p36, %s38, %s29
      %p40 = scmp.ge.s32.totalorder %s39, 2
      %s41 = scalar_select %p40, 0, %s39
      %s42 = ssub.s32 %s29, %s41
      %s43 = ssub.s32 %s30, %s37
      %s44 = sor.u32 %s42, %s43
      %p45 = scmp.eq.s32.totalorder %s44, 0
      %s47 = sadd.s32 %s46, 1
      %s48 = scalar_select %p45, %s46, %s47
      %p51 = pneg %p45
      %p52 = scmp.eq.s32.totalorder %s22, 1
      %p53 = por %p51, %p52
      %p54 = scmp.ne.s32.totalorder %s46, %s49
      %p55 = scmp.eq.s32.totalorder %s22, 0
      %p56 = por %p54, %p55
      %p57 = scmp.ne.s32.totalorder %s46, %s49
      %p58 = scmp.eq.s32.totalorder %s27, 1
      %p59 = por %p57, %p58
      %p60 = scmp.ne.s32.totalorder %s49, %s50
      %p61 = scmp.eq.s32.totalorder %s27, 0
      %p62 = por %p60, %p61
      %p63 = scmp.ne.s32.totalorder %s49, %s50
      %p64 = scmp.eq.s32.totalorder %s28, 1
      %p65 = por %p63, %p64
      %p67 = scmp.ne.s32.totalorder %s50, %s66
      %p68 = scmp.eq.s32.totalorder %s28, 0
      %p69 = por %p67, %p68
      %s70 = ssub.s32 %s29, %s41
      %s71 = ssub.s32 %s30, %s37
      %s72 = sor.u32 %s70, %s71
      %p73 = scmp.eq.s32.totalorder %s72, 0
      %s75 = sadd.s32 %s74, 1
      %s76 = scalar_select %p73, %s74, %s75
      %p79 = pneg %p73
      %p80 = scmp.eq.s32.totalorder %s22, 1
      %p81 = por %p79, %p80
      %p82 = scmp.ne.s32.totalorder %s74, %s77
      %p83 = scmp.eq.s32.totalorder %s22, 0
      %p84 = por %p82, %p83
      %p85 = scmp.ne.s32.totalorder %s74, %s77
      %p86 = scmp.eq.s32.totalorder %s27, 1
      %p87 = por %p85, %p86
      %p88 = scmp.ne.s32.totalorder %s77, %s78
      %p89 = scmp.eq.s32.totalorder %s27, 0
      %p90 = por %p88, %p89
      %p91 = scmp.ne.s32.totalorder %s77, %s78
      %p92 = scmp.eq.s32.totalorder %s28, 1
      %p93 = por %p91, %p92
      %p95 = scmp.ne.s32.totalorder %s78, %s94
      %p96 = scmp.eq.s32.totalorder %s28, 0
      %p97 = por %p95, %p96
      %s98 = ssub.s32 %s29, %s41
      %s99 = ssub.s32 %s30, %s37
      %s100 = sor.u32 %s98, %s99
      %p101 = scmp.eq.s32.totalorder %s100, 0
      %s103 = sadd.s32 %s102, 1
      %s104 = scalar_select %p101, %s102, %s103
      %p107 = pneg %p101
      %p108 = scmp.eq.s32.totalorder %s22, 1
      %p109 = por %p107, %p108
      %p110 = scmp.ne.s32.totalorder %s102, %s105
      %p111 = scmp.eq.s32.totalorder %s22, 0
      %p112 = por %p110, %p111
      %p113 = scmp.ne.s32.totalorder %s102, %s105
      %p114 = scmp.eq.s32.totalorder %s27, 1
      %p115 = por %p113, %p114
      %p116 = scmp.ne.s32.totalorder %s105, %s106
      %p117 = scmp.eq.s32.totalorder %s27, 0
      %p118 = por %p116, %p117
      %p119 = scmp.ne.s32.totalorder %s105, %s106
      %p120 = scmp.eq.s32.totalorder %s28, 1
      %p121 = por %p119, %p120
      %p123 = scmp.ne.s32.totalorder %s106, %s122
      %p124 = scmp.eq.s32.totalorder %s28, 0
      %p125 = por %p123, %p124
      %s126 = ssub.s32 %s29, %s41
      %s127 = ssub.s32 %s30, %s37
      %s128 = sor.u32 %s126, %s127
      %p129 = scmp.eq.s32.totalorder %s128, 0
      %s131 = sadd.s32 %s130, 1
      %s132 = scalar_select %p129, %s130, %s131
      %p135 = pneg %p129
      %p136 = scmp.eq.s32.totalorder %s22, 1
      %p137 = por %p135, %p136
      %p138 = scmp.ne.s32.totalorder %s130, %s133
      %p139 = scmp.eq.s32.totalorder %s22, 0
      %p140 = por %p138, %p139
      %p141 = scmp.ne.s32.totalorder %s130, %s133
      %p142 = scmp.eq.s32.totalorder %s27, 1
      %p143 = por %p141, %p142
      %p144 = scmp.ne.s32.totalorder %s133, %s134
      %p145 = scmp.eq.s32.totalorder %s27, 0
      %p146 = por %p144, %p145
      %p147 = scmp.ne.s32.totalorder %s133, %s134
      %p148 = scmp.eq.s32.totalorder %s28, 1
      %p149 = por %p147, %p148
      %p151 = scmp.ne.s32.totalorder %s134, %s150
      %p152 = scmp.eq.s32.totalorder %s28, 0
      %p153 = por %p151, %p152
      %p154 = scmp.le.s32.totalorder 1, %s22
      %p155 = scmp.lt.s32.totalorder %s22, 3
      %p156 = pnand %p154, %p155
      %p157 = pneg %p156
      // Predicated region
      $region9: #{tpu_custom_call.1} parent=5 // pred_check
        _
      $region10: #{tpu_custom_call.1} parent=5 // pred_check_branch
        %159 = sbr.rel (%p156) target = $region12
      $region11: #{tpu_custom_call.1} parent=5 // pred_region
        %s160 = ssub.s32 %s22, 1
      $region12: #{tpu_custom_call.1} parent=5 // pred_fallthru
        _
      %p161 = scmp.lt.s32.totalorder %s22, 2
      // Predicated region
      $region13: #{tpu_custom_call.1} parent=5 // pred_check
        %p162 = pneg %p161
      $region14: #{tpu_custom_call.1} parent=5 // pred_check_branch
        %164 = sbr.rel (%p162) target = $region16
      $region15: #{tpu_custom_call.1} parent=5 // pred_region
        // Predicated region
        $region17: #{tpu_custom_call.1} parent=15 // pred_check
          %p165 = pneg %p56
        $region18: #{tpu_custom_call.1} parent=15 // pred_check_branch
          %167 = sbr.rel (%p165) target = $region20
        $region19: #{tpu_custom_call.1} parent=15 // pred_region
          %s168 = sand.u32 %s46, 1
          %s169 = scalar_lea.sflag [#allocation3], %s168
          %s170 = sand.u32 %s46, 1
          %s171 = smul.addr %s170, 8
          %s172 = scalar_lea.vmem [#allocation2], %s171
          %s173 = smul.u32 2, %s30
          %s175 = ssub.s32 128, 128
          %176 = vsyncadd %s169, %s175
          %s177 = smul.addr %s29, 2
          %s178 = sadd.s32 %s173, %s177
          %s179 = smul.addr %s178, 64
          %s180 = scalar_lea.hbm %s0, %s179
          %s182 = sshll.u32 %s172, 4
          %s183 = int_to_ptr.vmem [resolvable:$true] %s182
          %185 = dma.hbm_to_vmem [thread:$0]  %s180, 128, %s183, %s169
        $region20: #{tpu_custom_call.1} parent=15 // pred_fallthru
          _
        // Predicated region
        $region21: #{tpu_custom_call.1} parent=15 // pred_check
          %p186 = pneg %p84
        $region22: #{tpu_custom_call.1} parent=15 // pred_check_branch
          %188 = sbr.rel (%p186) target = $region24
        $region23: #{tpu_custom_call.1} parent=15 // pred_region
          %s189 = sand.u32 %s74, 1
          %s190 = scalar_lea.sflag [#allocation6], %s189
          %s191 = sand.u32 %s74, 1
          %s192 = smul.addr %s191, 2
          %s193 = scalar_lea.vmem [#allocation5], %s192
          %s194 = smul.u32 2, %s30
          %s196 = ssub.s32 32, 32
          %197 = vsyncadd %s190, %s196
          %s198 = smul.addr %s29, 2
          %s199 = sadd.s32 %s194, %s198
          %s200 = smul.addr %s199, 16
          %s201 = scalar_lea.hbm %s1, %s200
          %s203 = sshll.u32 %s193, 4
          %s204 = int_to_ptr.vmem [resolvable:$true] %s203
          %206 = dma.hbm_to_vmem [thread:$0]  %s201, 32, %s204, %s190
        $region24: #{tpu_custom_call.1} parent=15 // pred_fallthru
          _
      $region16: #{tpu_custom_call.1} parent=5 // pred_fallthru
        _
      %p207 = scmp.le.s32.totalorder 1, %s22
      %p208 = scmp.lt.s32.totalorder %s22, 3
      %p209 = pnand %p207, %p208
      %p210 = pneg %p209
      // Predicated region
      $region25: #{tpu_custom_call.1} parent=5 // pred_check
        _
      $region26: #{tpu_custom_call.1} parent=5 // pred_check_branch
        %212 = sbr.rel (%p209) target = $region28
      $region27: #{tpu_custom_call.1} parent=5 // pred_region
        %s213 = ssub.s32 %s22, 1
        %s214 = sand.u32 %s49, 1
        %s215 = scalar_lea.sflag [#allocation3], %s214
        %s216 = sand.u32 %s49, 1
        %s217 = smul.addr %s216, 8
        %s218 = scalar_lea.vmem [#allocation2], %s217
        // Predicated region
        $region29: #{tpu_custom_call.1} parent=27 // pred_check
          %p219 = pneg %p62
        $region30: #{tpu_custom_call.1} parent=27 // pred_check_branch
          %221 = sbr.rel (%p219) target = $region32
        $region31: #{tpu_custom_call.1} parent=27 // pred_region
          %222 = dma.done %s215, 128
        $region32: #{tpu_custom_call.1} parent=27 // pred_fallthru
          _
        %s223 = sand.u32 %s77, 1
        %s224 = scalar_lea.sflag [#allocation6], %s223
        %s225 = sand.u32 %s77, 1
        %s226 = smul.addr %s225, 2
        %s227 = scalar_lea.vmem [#allocation5], %s226
        // Predicated region
        $region33: #{tpu_custom_call.1} parent=27 // pred_check
          %p228 = pneg %p90
        $region34: #{tpu_custom_call.1} parent=27 // pred_check_branch
          %230 = sbr.rel (%p228) target = $region36
        $region35: #{tpu_custom_call.1} parent=27 // pred_region
          %231 = dma.done %s224, 32
        $region36: #{tpu_custom_call.1} parent=27 // pred_fallthru
          _
        %s232 = sand.u32 %s49, 1
        %s233 = scalar_lea.sflag [#allocation3], %s232
        %s234 = sand.u32 %s49, 1
        %s235 = smul.addr %s234, 8
        %s236 = scalar_lea.vmem [#allocation2], %s235
        %p237 = pneg %p62
        %p238 = pneg %p59
        %s239 = sand.u32 %s77, 1
        %s240 = scalar_lea.sflag [#allocation6], %s239
        %s241 = sand.u32 %s77, 1
        %s242 = smul.addr %s241, 2
        %s243 = scalar_lea.vmem [#allocation5], %s242
        %p244 = pneg %p90
        %p245 = pneg %p87
        %p246 = pneg %p118
        %p247 = pneg %p115
        %s248 = sand.u32 %s105, 1
        %s249 = scalar_lea.sflag [#allocation4], %s248
        %s250 = sand.u32 %s105, 1
        %s251 = scalar_lea.vmem [#allocation7], %s250
        %p252 = pneg %p146
        %p253 = pneg %p143
        %s254 = sand.u32 %s133, 1
        %s255 = scalar_lea.sflag [#allocation9], %s254
        %s256 = sand.u32 %s133, 1
        %s257 = scalar_lea.vmem [#allocation8], %s256
        %s258 = smul.u32 2, %s32
        %s259 = smul.u32 2, %s32
        %v260 = vld [vmem:[%s218] sm:$0xff]
        %v261 = vld [vmem:[%s227] sm:$0x3]
        %vm262 = vcmp.ge.s32.totalorder %v261, 0
        %vm263 = vcmp.ne.s32.totalorder %v261, 255
        %vm264 = vmand %vm262, %vm263
        %vm265 = vcmp.lt.s32.totalorder %v261, 4
        %vm266 = vmand %vm264, %vm265
        %v267 = vsel %vm266, %v261, 0
        %v269 = vcombine.high %v260, %v260
        %vm271 = vcmask 1043456
        %v272 = vsel %vm271, %v260, -inf
        %v273 = vrot.slane %v272, 4
        %v274 = vmax.f32 %v272, %v273
        %v275 = vrot.slane %v274, 2
        %v276 = vmax.f32 %v274, %v275
        %v277 = vrot.slane %v276, 1
        %v278 = vmax.f32 %v276, %v277
        %v279 = vsel %vm271, %v269, -inf
        %v280 = vrot.slane %v279, 4
        %v281 = vmax.f32 %v279, %v280
        %v282 = vrot.slane %v281, 2
        %v283 = vmax.f32 %v281, %v282
        %v284 = vrot.slane %v283, 1
        %v285 = vmax.f32 %v283, %v284
        %v288 = vcombine.low %v278, %v285
        %v290 = vsub.f32 %v260, %v288
        %v291 = vmul.f32 %v290, 1.442695
        %v292 = vpow.pop %v291
        %v294 = vcombine.high %v292, %v292
        %v296 = vsel %vm271, %v292, 0.0
        %v297 = vrot.slane %v296, 4
        %v298 = vadd.f32 %v296, %v297
        %v299 = vrot.slane %v298, 2
        %v300 = vadd.f32 %v298, %v299
        %v301 = vrot.slane %v300, 1
        %v302 = vadd.f32 %v300, %v301
        %v303 = vsel %vm271, %v294, 0.0
        %v304 = vrot.slane %v303, 4
        %v305 = vadd.f32 %v303, %v304
        %v306 = vrot.slane %v305, 2
        %v307 = vadd.f32 %v305, %v306
        %v308 = vrot.slane %v307, 1
        %v309 = vadd.f32 %v307, %v308
        %v310 = vlog2.pop %v302
        %v311 = vmul.f32 %v310, 0.6931472
        %v312 = vlog2.pop %v309
        %v313 = vmul.f32 %v312, 0.6931472
        %v314 = vadd.f32 %v278, %v311
        %v315 = vadd.f32 %v285, %v313
        %v316 = vlaneseq
        %v317 = vshrl.u32 %v316, 7
        %v318 = vlaneseq
        %v319 = vshrl.u32 %v318, 7
        %v320 = vsub.s32 0, %v319
        %v321 = vrot.slane %v267, %v320
        %v322 = vlaneseq
        %v323 = vshrl.u32 %v322, 7
        %v324 = vsub.s32 1, %v323
        %v325 = vrot.slane %v267, %v324
        %vm326 = vcmp.eq.s32.totalorder %v317, %v321
        %vm327 = vcmp.eq.s32.totalorder %v317, %v325
        %v328 = vsel %vm326, %v260, 0.0
        %v329 = vsel %vm327, %v269, 0.0
        %v330 = vsel %vm271, %v328, 0.0
        %v331 = vrot.slane %v330, 4
        %v332 = vadd.f32 %v330, %v331
        %v333 = vrot.slane %v332, 2
        %v334 = vadd.f32 %v332, %v333
        %v335 = vrot.slane %v334, 1
        %v336 = vadd.f32 %v334, %v335
        %v337 = vsel %vm271, %v329, 0.0
        %v338 = vrot.slane %v337, 4
        %v339 = vadd.f32 %v337, %v338
        %v340 = vrot.slane %v339, 2
        %v341 = vadd.f32 %v339, %v340
        %v342 = vrot.slane %v341, 1
        %v343 = vadd.f32 %v341, %v342
        %v344 = vsub.f32 %v314, %v336
        %v345 = vsub.f32 %v315, %v343
        %v348 = vcombine.low %v344, %v345
        %v350 = vunpack.c.l.s4 1966171168
        %v351 = vunpack.c.0.s8 %v350
        %v352 = vlaneseq
        %v353 = vshrl.u32 %v352, 7
        %v354 = vsub.s32 %v351, %v353
        %v355 = vrot.slane %v348, %v354
        %v357 = vunpack.c.l.s4 1966171168
        %v358 = vunpack.c.0.s8 %v357
        %v359 = vlaneseq
        %v360 = vshrl.u32 %v359, 7
        %v361 = vsub.s32 %v358, %v360
        %v362 = vrot.slane %v355, %v361
        %v364 = vsel %vm266, %v362, 0.0
        %v365 = vsel %vm266, 1, 0
        %v366 = vcvt.s32.f32 %v365
        %v368 = vlaneseq
        %v369 = vshrl.u32 %v368, 7
        %v370 = vsub.s32 0, %v369
        %v371 = vrot.slane %v364, %v370
        %v372 = vlaneseq
        %v373 = vshrl.u32 %v372, 7
        %v374 = vsub.s32 1, %v373
        %v375 = vrot.slane %v364, %v374
        %vm378 = vcmask 1040384
        %v379 = vsel %vm378, %v371, 0.0
        %v380 = vsel %vm378, %v375, 0.0
        %v381 = vadd.f32 %v379, %v380
        %382 = vadd.xlane.f32.xlu0 %v381
        %v383 = vpop.xlane.xlu0 %382
        %v384 = vrot.slane %v383, 4
        %v385 = vadd.f32 %v383, %v384
        %v386 = vrot.slane %v385, 2
        %v387 = vadd.f32 %v385, %v386
        %v388 = vrot.slane %v387, 1
        %v389 = vadd.f32 %v387, %v388
        %s390 = vtos %v389
        %v391 = vstv %s390
        %392 = vst [vmem:[%s251] sm:$0x1] %v391
        %v394 = vlaneseq
        %v395 = vshrl.u32 %v394, 7
        %v396 = vsub.s32 0, %v395
        %v397 = vrot.slane %v366, %v396
        %v398 = vlaneseq
        %v399 = vshrl.u32 %v398, 7
        %v400 = vsub.s32 1, %v399
        %v401 = vrot.slane %v366, %v400
        %v404 = vsel %vm378, %v397, 0.0
        %v405 = vsel %vm378, %v401, 0.0
        %v406 = vadd.f32 %v404, %v405
        %407 = vadd.xlane.f32.xlu0 %v406
        %v408 = vpop.xlane.xlu0 %407
        %v409 = vrot.slane %v408, 4
        %v410 = vadd.f32 %v408, %v409
        %v411 = vrot.slane %v410, 2
        %v412 = vadd.f32 %v410, %v411
        %v413 = vrot.slane %v412, 1
        %v414 = vadd.f32 %v412, %v413
        %s415 = vtos %v414
        %v416 = vstv %s415
        %417 = vst [vmem:[%s257] sm:$0x1] %v416
        %s418 = sand.u32 %s105, 1
        %s419 = scalar_lea.sflag [#allocation4], %s418
        %s420 = sand.u32 %s105, 1
        %s421 = scalar_lea.vmem [#allocation7], %s420
        %s422 = sand.u32 %s133, 1
        %s423 = scalar_lea.sflag [#allocation9], %s422
        %s424 = sand.u32 %s133, 1
        %s425 = scalar_lea.vmem [#allocation8], %s424
        // Predicated region
        $region37: #{tpu_custom_call.1} parent=27 // pred_check
          %p426 = pneg %p115
        $region38: #{tpu_custom_call.1} parent=27 // pred_check_branch
          %428 = sbr.rel (%p426) target = $region40
        $region39: #{tpu_custom_call.1} parent=27 // pred_region
          %s430 = ssub.s32 16, 16
          %431 = vsyncadd %s419, %s430
          %s432 = sadd.s32 %s32, %s31
          %s433 = smul.addr %s432, 16
          %s434 = scalar_lea.hbm %s2, %s433
          %s436 = sshll.u32 %s421, 4
          %s437 = int_to_ptr.vmem [resolvable:$true] %s436
          %439 = dma.vmem_to_hbm [thread:$0]  %s437, 16, %s434, %s419
        $region40: #{tpu_custom_call.1} parent=27 // pred_fallthru
          _
        // Predicated region
        $region41: #{tpu_custom_call.1} parent=27 // pred_check
          %p440 = pneg %p143
        $region42: #{tpu_custom_call.1} parent=27 // pred_check_branch
          %442 = sbr.rel (%p440) target = $region44
        $region43: #{tpu_custom_call.1} parent=27 // pred_region
          %s444 = ssub.s32 16, 16
          %445 = vsyncadd %s423, %s444
          %s446 = sadd.s32 %s32, %s31
          %s447 = smul.addr %s446, 16
          %s448 = scalar_lea.hbm %s3, %s447
          %s450 = sshll.u32 %s425, 4
          %s451 = int_to_ptr.vmem [resolvable:$true] %s450
          %453 = dma.vmem_to_hbm [thread:$0]  %s451, 16, %s448, %s423
        $region44: #{tpu_custom_call.1} parent=27 // pred_fallthru
          _
      $region28: #{tpu_custom_call.1} parent=5 // pred_fallthru
        _
      %p454 = scmp.le.s32.totalorder 2, %s22
      // Predicated region
      $region45: #{tpu_custom_call.1} parent=5 // pred_check
        %p455 = pneg %p454
      $region46: #{tpu_custom_call.1} parent=5 // pred_check_branch
        %457 = sbr.rel (%p455) target = $region48
      $region47: #{tpu_custom_call.1} parent=5 // pred_region
        %s458 = ssub.s32 %s22, 2
        // Predicated region
        $region49: #{tpu_custom_call.1} parent=47 // pred_check
          %p459 = pneg %p121
        $region50: #{tpu_custom_call.1} parent=47 // pred_check_branch
          %461 = sbr.rel (%p459) target = $region52
        $region51: #{tpu_custom_call.1} parent=47 // pred_region
          %s462 = sand.u32 %s106, 1
          %s463 = scalar_lea.sflag [#allocation4], %s462
          %s464 = sand.u32 %s106, 1
          %s465 = scalar_lea.vmem [#allocation7], %s464
          %466 = dma.done %s463, 16
        $region52: #{tpu_custom_call.1} parent=47 // pred_fallthru
          _
        // Predicated region
        $region53: #{tpu_custom_call.1} parent=47 // pred_check
          %p467 = pneg %p149
        $region54: #{tpu_custom_call.1} parent=47 // pred_check_branch
          %469 = sbr.rel (%p467) target = $region56
        $region55: #{tpu_custom_call.1} parent=47 // pred_region
          %s470 = sand.u32 %s134, 1
          %s471 = scalar_lea.sflag [#allocation9], %s470
          %s472 = sand.u32 %s134, 1
          %s473 = scalar_lea.vmem [#allocation8], %s472
          %474 = dma.done %s471, 16
        $region56: #{tpu_custom_call.1} parent=47 // pred_fallthru
          _
      $region48: #{tpu_custom_call.1} parent=5 // pred_fallthru
        _
    $region6: #{tpu_custom_call.1} parent=1 // loop_footer
      %s26 = sadd.s32 1, %s22
    $region7: #{tpu_custom_call.1} parent=1 // loop_footer_branch
      %21 = sbr.rel target = $region3
    $region8: #{tpu_custom_call.1} parent=1 // loop_exit
      _
    %475 = vsyncpa [#allocation3], 1
    %s476 = scalar_lea.sflag [#allocation3], 1
    %477 = vsyncpa %s476, 1
    %478 = vsyncpa [#allocation6], 1
    %s479 = scalar_lea.sflag [#allocation6], 1
    %480 = vsyncpa %s479, 1
    %481 = vsyncpa [#allocation4], 1
    %s482 = scalar_lea.sflag [#allocation4], 1
    %483 = vsyncpa %s482, 1
    %484 = vsyncpa [#allocation9], 1
    %s485 = scalar_lea.sflag [#allocation9], 1
    %486 = vsyncpa %s485, 1

</llo_original>
